<compile_context>
chip_gen: v7x
topology: tpu7x:2x2x1
jax: 0.10.0
libtpu: 0.0.40
codegen_flags: <defaults>
</compile_context>

<pallas_src>
import jax
import jax.numpy as jnp
from jax.experimental import pallas as pl
from jax.experimental.pallas import tpu as pltpu


def late_fusion_kernel(
    img_ref,    # (B, Dimg)            flattened image modality
    txt_ref,    # (B, S, Dt)           text modality
    wi1_ref,    # (Dimg, H)            image encoder layer 1
    wt1_ref,    # (Dt, H)              text encoder layer 1 (1/S pre-folded)
    whead_ref,  # (2, H, H)            fused (encoder-layer-2 @ head-layer-1), [img, txt]
    wout_ref,   # (H, C_pad)           head layer 2, zero-padded to 128 lanes
    b_ref,      # (4, C_pad)           packed biases: [bi1 | bt1 | b_fused | b_out]
    out_ref,    # (B, C_pad)
):
    H = wi1_ref.shape[1]

    img = img_ref[...]                               # (B, Dimg)
    txt_sum = jnp.sum(txt_ref[...], axis=1)          # (B, Dt); mean-pool's 1/S lives in wt1

    # ---- encoder first layers (ReLU) ----------------------------------------
    h_img = jnp.maximum(
        jnp.dot(img, wi1_ref[...], preferred_element_type=jnp.float32)
        + b_ref[0:1, :H], 0.0)
    h_txt = jnp.maximum(
        jnp.dot(txt_sum, wt1_ref[...], preferred_element_type=jnp.float32)
        + b_ref[1:2, :H], 0.0)

    # ---- fusion + head layer 1 (encoder second layers algebraically folded) -
    # concat([e_img, e_txt]) @ Wh1 == h_img @ (wi2 @ Wh1[:H]) + h_txt @ (wt2 @ Wh1[H:]) + b_fused
    fused = jnp.maximum(
        jnp.dot(h_img, whead_ref[0], preferred_element_type=jnp.float32)
        + jnp.dot(h_txt, whead_ref[1], preferred_element_type=jnp.float32)
        + b_ref[2:3, :H], 0.0)

    # ---- head layer 2 (lane-dense, zero-padded classes) ----------------------
    logits = (jnp.dot(fused, wout_ref[...], preferred_element_type=jnp.float32)
              + b_ref[3:4, :])
    out_ref[...] = logits.astype(out_ref.dtype)


def late_fusion_forward(modalities, params):
    """modalities: {"image": (B,C,H,W), "text": (B,S,Dt)} -- sorted-key fusion order."""
    img = modalities["image"]
    txt = modalities["text"]
    B = img.shape[0]
    S, Dt = txt.shape[1], txt.shape[2]
    img_flat = img.reshape(B, -1)                    # NCHW flattened row-major
    Dimg = img_flat.shape[1]

    (wi1, bi1, wi2, bi2,
     wt1, bt1, wt2, bt2,
     wh1, bh1, wh2, bh2) = params
    H = wi2.shape[1]
    num_classes = wh2.shape[1]
    C_pad = 128                                      # lane-dense output width

    # Host-side (trace-time) algebraic folds — mathematically identical to the module.
    wt1_scaled = wt1 * (1.0 / S)                     # mean-pool -> sum-pool in kernel
    w_head = jnp.stack([wi2 @ wh1[:H], wt2 @ wh1[H:]], axis=0)        # (2, H, H)
    b_fused = bi2 @ wh1[:H] + bt2 @ wh1[H:] + bh1                     # (1, H)

    # Lane-dense head output: pad classes to 128.
    w_out = jnp.zeros((H, C_pad), jnp.float32).at[:, :num_classes].set(wh2)
    b_out = jnp.zeros((1, C_pad), jnp.float32).at[:, :num_classes].set(bh2)

    # Pack all biases into one (4, 128) slab (hidden-width rows zero-padded past H).
    biases = jnp.zeros((4, C_pad), jnp.float32)
    biases = biases.at[0, :H].set(bi1[0])
    biases = biases.at[1, :H].set(bt1[0])
    biases = biases.at[2, :H].set(b_fused[0])
    biases = biases.at[3, :].set(b_out[0])

    # Advisory cost estimate: 5 matmuls + pooling; bytes dominated by f32 weights.
    flops = 2 * B * (Dimg * H + Dt * H + 2 * H * H + H * C_pad)
    bytes_accessed = 4 * (
        B * Dimg + B * S * Dt                 # activations in
        + Dimg * H + Dt * H + 2 * H * H + H * C_pad + 4 * C_pad   # weights + biases
        + B * C_pad)                          # logits out
    cost = pl.CostEstimate(flops=flops, transcendentals=0,
                           bytes_accessed=bytes_accessed)

    n_in = 7
    out_pad = pl.pallas_call(
        late_fusion_kernel,
        out_shape=jax.ShapeDtypeStruct((B, C_pad), jnp.float32),
        in_specs=[pl.BlockSpec(memory_space=pltpu.MemorySpace.VMEM)] * n_in,
        out_specs=pl.BlockSpec(memory_space=pltpu.MemorySpace.VMEM),
        cost_estimate=cost,
    )(img_flat, txt, wi1, wt1_scaled, w_head, w_out, biases)

    return out_pad[:, :num_classes]


def reference_forward(modalities, params):
    """Pure-JAX reference mirroring LateFusionArchitecture.forward (unfused math)."""
    (wi1, bi1, wi2, bi2,
     wt1, bt1, wt2, bt2,
     wh1, bh1, wh2, bh2) = params
    img = modalities["image"].reshape(modalities["image"].shape[0], -1)
    txt = jnp.mean(modalities["text"], axis=1)
    e_img = jnp.maximum(img @ wi1 + bi1, 0.0) @ wi2 + bi2
    e_txt = jnp.maximum(txt @ wt1 + bt1, 0.0) @ wt2 + bt2
    fused = jnp.concatenate([e_img, e_txt], axis=-1)  # sorted keys: image, text
    h = jnp.maximum(fused @ wh1 + bh1, 0.0)
    return h @ wh2 + bh2


def make_params(key, dimg, dtxt, hidden, num_classes):
    ks = jax.random.split(key, 12)
    def lin(k, fan_in, fan_out):
        scale = 1.0 / jnp.sqrt(fan_in)
        return jax.random.uniform(k, (fan_in, fan_out), jnp.float32, -scale, scale)
    wi1 = lin(ks[0], dimg, hidden);   bi1 = jnp.zeros((1, hidden), jnp.float32)
    wi2 = lin(ks[1], hidden, hidden); bi2 = jnp.full((1, hidden), 0.01, jnp.float32)
    wt1 = lin(ks[2], dtxt, hidden);   bt1 = jnp.zeros((1, hidden), jnp.float32)
    wt2 = lin(ks[3], hidden, hidden); bt2 = jnp.full((1, hidden), -0.01, jnp.float32)
    wh1 = lin(ks[4], 2 * hidden, hidden);   bh1 = jnp.zeros((1, hidden), jnp.float32)
    wh2 = lin(ks[5], hidden, num_classes);  bh2 = jnp.zeros((1, num_classes), jnp.float32)
    return (wi1, bi1, wi2, bi2, wt1, bt1, wt2, bt2, wh1, bh1, wh2, bh2)


if __name__ == "__main__":
    B, C, Hh, Ww = 2, 4, 16, 16          # image modality (NCHW)
    S, Dt = 8, 32                        # text modality (seq, features)
    hidden, num_classes = 64, 8

    key = jax.random.PRNGKey(0)
    k_img, k_txt, k_par = jax.random.split(key, 3)
    modalities = {
        "image": jax.random.normal(k_img, (B, C, Hh, Ww), jnp.float32),
        "text":  jax.random.normal(k_txt, (B, S, Dt), jnp.float32),
    }
    params = make_params(k_par, C * Hh * Ww, Dt, hidden, num_classes)

    out = late_fusion_forward(modalities, params)
    out = jax.block_until_ready(out)

    ref = reference_forward(modalities, params)
    assert out.shape == (B, num_classes)
    assert jnp.allclose(out, ref, atol=1e-4, rtol=1e-4), "mismatch vs reference"
    print("KERNEL_OK")
</pallas_src>

<mosaic_0001>
module attributes {stable_mosaic.version = 11 : i64} {
  func.func @late_fusion_kernel(%arg0: memref<2x1024xf32, #tpu.memory_space<vmem>>, %arg1: memref<2x8x32xf32, #tpu.memory_space<vmem>>, %arg2: memref<1024x64xf32, #tpu.memory_space<vmem>>, %arg3: memref<32x64xf32, #tpu.memory_space<vmem>>, %arg4: memref<2x64x64xf32, #tpu.memory_space<vmem>>, %arg5: memref<64x128xf32, #tpu.memory_space<vmem>>, %arg6: memref<4x128xf32, #tpu.memory_space<vmem>>, %arg7: memref<2x128xf32, #tpu.memory_space<vmem>>) attributes {dimension_semantics = [], scalar_prefetch = 0 : i64, scratch_operands = 0 : i64, tpu.core_type = #tpu.core_type<tc>} {
    %c0 = arith.constant 0 : index
    %c0_0 = arith.constant 0 : index
    %0 = vector.load %arg0[%c0, %c0_0] : memref<2x1024xf32, #tpu.memory_space<vmem>>, vector<2x1024xf32>
    %c0_1 = arith.constant 0 : index
    %c0_2 = arith.constant 0 : index
    %c0_3 = arith.constant 0 : index
    %1 = vector.load %arg1[%c0_1, %c0_2, %c0_3] : memref<2x8x32xf32, #tpu.memory_space<vmem>>, vector<2x8x32xf32>
    %cst = arith.constant dense<0.000000e+00> : vector<2x32xf32>
    %2 = vector.multi_reduction <add>, %1, %cst [1] : vector<2x8x32xf32> to vector<2x32xf32>
    %c0_4 = arith.constant 0 : index
    %c0_5 = arith.constant 0 : index
    %3 = vector.load %arg2[%c0_4, %c0_5] : memref<1024x64xf32, #tpu.memory_space<vmem>>, vector<1024x64xf32>
    %cst_6 = arith.constant dense<0.000000e+00> : vector<2x64xf32>
    %4 = tpu.matmul %0, %3, %cst_6 {dimension_numbers = #tpu.dot_dimension_numbers<[1], [0], [0], [1], [0, 0, 1, 1], [], []>} : vector<2x1024xf32>, vector<1024x64xf32>, vector<2x64xf32> -> vector<2x64xf32>
    %c0_7 = arith.constant 0 : index
    %c0_8 = arith.constant 0 : index
    %5 = vector.load %arg6[%c0_7, %c0_8] : memref<4x128xf32, #tpu.memory_space<vmem>>, vector<1x64xf32>
    %6 = vector.broadcast %5 : vector<1x64xf32> to vector<2x64xf32>
    %7 = arith.addf %4, %6 : vector<2x64xf32>
    %cst_9 = arith.constant 0.000000e+00 : f32
    %8 = vector.broadcast %cst_9 : f32 to vector<2x64xf32>
    %9 = arith.maximumf %7, %8 : vector<2x64xf32>
    %c0_10 = arith.constant 0 : index
    %c0_11 = arith.constant 0 : index
    %10 = vector.load %arg3[%c0_10, %c0_11] : memref<32x64xf32, #tpu.memory_space<vmem>>, vector<32x64xf32>
    %cst_12 = arith.constant dense<0.000000e+00> : vector<2x64xf32>
    %11 = tpu.matmul %2, %10, %cst_12 {dimension_numbers = #tpu.dot_dimension_numbers<[1], [0], [0], [1], [0, 0, 1, 1], [], []>} : vector<2x32xf32>, vector<32x64xf32>, vector<2x64xf32> -> vector<2x64xf32>
    %c1 = arith.constant 1 : index
    %c0_13 = arith.constant 0 : index
    %12 = vector.load %arg6[%c1, %c0_13] : memref<4x128xf32, #tpu.memory_space<vmem>>, vector<1x64xf32>
    %13 = vector.broadcast %12 : vector<1x64xf32> to vector<2x64xf32>
    %14 = arith.addf %11, %13 : vector<2x64xf32>
    %cst_14 = arith.constant 0.000000e+00 : f32
    %15 = vector.broadcast %cst_14 : f32 to vector<2x64xf32>
    %16 = arith.maximumf %14, %15 : vector<2x64xf32>
    %c0_15 = arith.constant 0 : index
    %c0_16 = arith.constant 0 : index
    %c0_17 = arith.constant 0 : index
    %17 = vector.load %arg4[%c0_15, %c0_16, %c0_17] : memref<2x64x64xf32, #tpu.memory_space<vmem>>, vector<1x64x64xf32>
    %18 = vector.shape_cast %17 : vector<1x64x64xf32> to vector<64x64xf32>
    %cst_18 = arith.constant dense<0.000000e+00> : vector<2x64xf32>
    %19 = tpu.matmul %9, %18, %cst_18 {dimension_numbers = #tpu.dot_dimension_numbers<[1], [0], [0], [1], [0, 0, 1, 1], [], []>} : vector<2x64xf32>, vector<64x64xf32>, vector<2x64xf32> -> vector<2x64xf32>
    %c1_19 = arith.constant 1 : index
    %c0_20 = arith.constant 0 : index
    %c0_21 = arith.constant 0 : index
    %20 = vector.load %arg4[%c1_19, %c0_20, %c0_21] : memref<2x64x64xf32, #tpu.memory_space<vmem>>, vector<1x64x64xf32>
    %21 = vector.shape_cast %20 : vector<1x64x64xf32> to vector<64x64xf32>
    %cst_22 = arith.constant dense<0.000000e+00> : vector<2x64xf32>
    %22 = tpu.matmul %16, %21, %cst_22 {dimension_numbers = #tpu.dot_dimension_numbers<[1], [0], [0], [1], [0, 0, 1, 1], [], []>} : vector<2x64xf32>, vector<64x64xf32>, vector<2x64xf32> -> vector<2x64xf32>
    %23 = arith.addf %19, %22 : vector<2x64xf32>
    %c2 = arith.constant 2 : index
    %c0_23 = arith.constant 0 : index
    %24 = vector.load %arg6[%c2, %c0_23] : memref<4x128xf32, #tpu.memory_space<vmem>>, vector<1x64xf32>
    %25 = vector.broadcast %24 : vector<1x64xf32> to vector<2x64xf32>
    %26 = arith.addf %23, %25 : vector<2x64xf32>
    %cst_24 = arith.constant 0.000000e+00 : f32
    %27 = vector.broadcast %cst_24 : f32 to vector<2x64xf32>
    %28 = arith.maximumf %26, %27 : vector<2x64xf32>
    %c0_25 = arith.constant 0 : index
    %c0_26 = arith.constant 0 : index
    %29 = vector.load %arg5[%c0_25, %c0_26] : memref<64x128xf32, #tpu.memory_space<vmem>>, vector<64x128xf32>
    %cst_27 = arith.constant dense<0.000000e+00> : vector<2x128xf32>
    %30 = tpu.matmul %28, %29, %cst_27 {dimension_numbers = #tpu.dot_dimension_numbers<[1], [0], [0], [1], [0, 0, 1, 1], [], []>} : vector<2x64xf32>, vector<64x128xf32>, vector<2x128xf32> -> vector<2x128xf32>
    %c3 = arith.constant 3 : index
    %c0_28 = arith.constant 0 : index
    %31 = vector.load %arg6[%c3, %c0_28] : memref<4x128xf32, #tpu.memory_space<vmem>>, vector<1x128xf32>
    %32 = vector.broadcast %31 : vector<1x128xf32> to vector<2x128xf32>
    %33 = arith.addf %30, %32 : vector<2x128xf32>
    %c0_29 = arith.constant 0 : index
    %c0_30 = arith.constant 0 : index
    %34 = vector.load %arg7[%c0_29, %c0_30] : memref<2x128xf32, #tpu.memory_space<vmem>>, vector<2x128xf32>
    tpu.vector_store %arg7[%c0_29, %c0_30], %33 {strides = array<i32>} : memref<2x128xf32, #tpu.memory_space<vmem>>, vector<2x128xf32>,
    return
  }
}

</mosaic_0001>

<llo_original>
// kernel: tpu_custom_call.1
$region0: #{tpu_custom_call.1}
  #allocation0 [shape = 'u32[]', space=smem, size = 0x4, offset = 0x4, fixed_abs, tag = 'smem constant byte address 0x4 - core index']
  #allocation1 [shape = 'u32[144,128]{1,0:T(1,128)}', space=vmem, size = 0x12000, scoped, tag = 'internal scratch']
  %s0 = inlined_call_operand.vmem [shape: f32[2,1024], index: 0, kind: input, shape index: {}]
  %s1 = inlined_call_operand.vmem [shape: f32[2,8,32], index: 1, kind: input, shape index: {}]
  %s2 = inlined_call_operand.vmem [shape: f32[1024,64], index: 2, kind: input, shape index: {}]
  %s3 = inlined_call_operand.vmem [shape: f32[32,64], index: 3, kind: input, shape index: {}]
  %s4 = inlined_call_operand.vmem [shape: f32[2,64,64], index: 4, kind: input, shape index: {}]
  %s5 = inlined_call_operand.vmem [shape: f32[64,128], index: 5, kind: input, shape index: {}]
  %s6 = inlined_call_operand.vmem [shape: f32[4,128], index: 6, kind: input, shape index: {}]
  %s7 = inlined_call_operand.hbm [shape: f32[2,128], index: 7, kind: output, shape index: {}]
  %s8 = sld [smem:[#allocation0]]
  $region38: #{tpu_custom_call.1} parent=0
    _
  %s10 = ssub.s32 1, %s8
  %s11 = scalar_select 0, %s10, %s8
  $region1: #{tpu_custom_call.1} parent=0
    #allocation2 [shape = 'u8[1024]{0}', space=vmem, size = 0x400, scoped, tag = 'output window, operand 0, single buffered']
    #allocation3 [shape = 's32[1]{0}', space=sflag, size = 0x4, scoped, tag = 'scoped memory for tpu_custom_call.1']
    %12 = vsyncpa [#allocation3], 0
    // Predicated region
    $region2: #{tpu_custom_call.1} parent=1 // pred_check
      _
    $region3: #{tpu_custom_call.1} parent=1 // pred_check_branch
      %14 = sbr.rel (0) target = $region5
    $region4: #{tpu_custom_call.1} parent=1 // pred_region
      _
    $region5: #{tpu_custom_call.1} parent=1 // pred_fallthru
      _
    // Predicated region
    $region6: #{tpu_custom_call.1} parent=1 // pred_check
      _
    $region7: #{tpu_custom_call.1} parent=1 // pred_check_branch
      %16 = sbr.rel (0) target = $region9
    $region8: #{tpu_custom_call.1} parent=1 // pred_region
      _
    $region9: #{tpu_custom_call.1} parent=1 // pred_fallthru
      _
    // Predicated region
    $region10: #{tpu_custom_call.1} parent=1 // pred_check
      _
    $region11: #{tpu_custom_call.1} parent=1 // pred_check_branch
      %18 = sbr.rel (0) target = $region13
    $region12: #{tpu_custom_call.1} parent=1 // pred_region
      _
    $region13: #{tpu_custom_call.1} parent=1 // pred_fallthru
      _
    // Predicated region
    $region14: #{tpu_custom_call.1} parent=1 // pred_check
      _
    $region15: #{tpu_custom_call.1} parent=1 // pred_check_branch
      %20 = sbr.rel (0) target = $region17
    $region16: #{tpu_custom_call.1} parent=1 // pred_region
      _
    $region17: #{tpu_custom_call.1} parent=1 // pred_fallthru
      _
    // Predicated region
    $region18: #{tpu_custom_call.1} parent=1 // pred_check
      _
    $region19: #{tpu_custom_call.1} parent=1 // pred_check_branch
      %22 = sbr.rel (0) target = $region21
    $region20: #{tpu_custom_call.1} parent=1 // pred_region
      _
    $region21: #{tpu_custom_call.1} parent=1 // pred_fallthru
      _
    // Predicated region
    $region22: #{tpu_custom_call.1} parent=1 // pred_check
      _
    $region23: #{tpu_custom_call.1} parent=1 // pred_check_branch
      %24 = sbr.rel (0) target = $region25
    $region24: #{tpu_custom_call.1} parent=1 // pred_region
      _
    $region25: #{tpu_custom_call.1} parent=1 // pred_fallthru
      _
    // Predicated region
    $region26: #{tpu_custom_call.1} parent=1 // pred_check
      _
    $region27: #{tpu_custom_call.1} parent=1 // pred_check_branch
      %26 = sbr.rel (0) target = $region29
    $region28: #{tpu_custom_call.1} parent=1 // pred_region
      _
    $region29: #{tpu_custom_call.1} parent=1 // pred_fallthru
      _
    %v27 = vld [vmem:[%s0] sm:$0xff]
    %v28 = vld [vmem:[%s0 + $0x8] sm:$0xff]
    %v29 = vld [vmem:[%s1] sm:$0xff]
    %v30 = vld [vmem:[%s1 + $0x8] sm:$0xff]
    %vm31 = vcmask 261120
    %v32 = vsel %vm31, %v29, 0.0
    %v33 = vrot.slane %v32, 4
    %v34 = vadd.f32 %v32, %v33
    %v35 = vrot.slane %v34, 2
    %v36 = vadd.f32 %v34, %v35
    %v37 = vrot.slane %v36, 1
    %v38 = vadd.f32 %v36, %v37
    %v39 = vsel %vm31, %v30, 0.0
    %v40 = vrot.slane %v39, 4
    %v41 = vadd.f32 %v39, %v40
    %v42 = vrot.slane %v41, 2
    %v43 = vadd.f32 %v41, %v42
    %v44 = vrot.slane %v43, 1
    %v45 = vadd.f32 %v43, %v44
    %v46 = vld [vmem:[%s2] sm:$0xff]
    %v47 = vld [vmem:[%s2 + $0x8] sm:$0xff]
    %v48 = vld [vmem:[%s2 + $0x10] sm:$0xff]
    %v49 = vld [vmem:[%s2 + $0x18] sm:$0xff]
    %v50 = vld [vmem:[%s2 + $0x20] sm:$0xff]
    %v51 = vld [vmem:[%s2 + $0x28] sm:$0xff]
    %v52 = vld [vmem:[%s2 + $0x30] sm:$0xff]
    %v53 = vld [vmem:[%s2 + $0x38] sm:$0xff]
    %v54 = vld [vmem:[%s2 + $0x40] sm:$0xff]
    %v55 = vld [vmem:[%s2 + $0x48] sm:$0xff]
    %v56 = vld [vmem:[%s2 + $0x50] sm:$0xff]
    %v57 = vld [vmem:[%s2 + $0x58] sm:$0xff]
    %v58 = vld [vmem:[%s2 + $0x60] sm:$0xff]
    %v59 = vld [vmem:[%s2 + $0x68] sm:$0xff]
    %v60 = vld [vmem:[%s2 + $0x70] sm:$0xff]
    %v61 = vld [vmem:[%s2 + $0x78] sm:$0xff]
    %v62 = vld [vmem:[%s2 + $0x80] sm:$0xff]
    %v63 = vld [vmem:[%s2 + $0x88] sm:$0xff]
    %v64 = vld [vmem:[%s2 + $0x90] sm:$0xff]
    %v65 = vld [vmem:[%s2 + $0x98] sm:$0xff]
    %v66 = vld [vmem:[%s2 + $0xa0] sm:$0xff]
    %v67 = vld [vmem:[%s2 + $0xa8] sm:$0xff]
    %v68 = vld [vmem:[%s2 + $0xb0] sm:$0xff]
    %v69 = vld [vmem:[%s2 + $0xb8] sm:$0xff]
    %v70 = vld [vmem:[%s2 + $0xc0] sm:$0xff]
    %v71 = vld [vmem:[%s2 + $0xc8] sm:$0xff]
    %v72 = vld [vmem:[%s2 + $0xd0] sm:$0xff]
    %v73 = vld [vmem:[%s2 + $0xd8] sm:$0xff]
    %v74 = vld [vmem:[%s2 + $0xe0] sm:$0xff]
    %v75 = vld [vmem:[%s2 + $0xe8] sm:$0xff]
    %v76 = vld [vmem:[%s2 + $0xf0] sm:$0xff]
    %v77 = vld [vmem:[%s2 + $0xf8] sm:$0xff]
    %v78 = vld [vmem:[%s2 + $0x100] sm:$0xff]
    %v79 = vld [vmem:[%s2 + $0x108] sm:$0xff]
    %v80 = vld [vmem:[%s2 + $0x110] sm:$0xff]
    %v81 = vld [vmem:[%s2 + $0x118] sm:$0xff]
    %v82 = vld [vmem:[%s2 + $0x120] sm:$0xff]
    %v83 = vld [vmem:[%s2 + $0x128] sm:$0xff]
    %v84 = vld [vmem:[%s2 + $0x130] sm:$0xff]
    %v85 = vld [vmem:[%s2 + $0x138] sm:$0xff]
    %v86 = vld [vmem:[%s2 + $0x140] sm:$0xff]
    %v87 = vld [vmem:[%s2 + $0x148] sm:$0xff]
    %v88 = vld [vmem:[%s2 + $0x150] sm:$0xff]
    %v89 = vld [vmem:[%s2 + $0x158] sm:$0xff]
    %v90 = vld [vmem:[%s2 + $0x160] sm:$0xff]
    %v91 = vld [vmem:[%s2 + $0x168] sm:$0xff]
    %v92 = vld [vmem:[%s2 + $0x170] sm:$0xff]
    %v93 = vld [vmem:[%s2 + $0x178] sm:$0xff]
    %v94 = vld [vmem:[%s2 + $0x180] sm:$0xff]
    %v95 = vld [vmem:[%s2 + $0x188] sm:$0xff]
    %v96 = vld [vmem:[%s2 + $0x190] sm:$0xff]
    %v97 = vld [vmem:[%s2 + $0x198] sm:$0xff]
    %v98 = vld [vmem:[%s2 + $0x1a0] sm:$0xff]
    %v99 = vld [vmem:[%s2 + $0x1a8] sm:$0xff]
    %v100 = vld [vmem:[%s2 + $0x1b0] sm:$0xff]
    %v101 = vld [vmem:[%s2 + $0x1b8] sm:$0xff]
    %v102 = vld [vmem:[%s2 + $0x1c0] sm:$0xff]
    %v103 = vld [vmem:[%s2 + $0x1c8] sm:$0xff]
    %v104 = vld [vmem:[%s2 + $0x1d0] sm:$0xff]
    %v105 = vld [vmem:[%s2 + $0x1d8] sm:$0xff]
    %v106 = vld [vmem:[%s2 + $0x1e0] sm:$0xff]
    %v107 = vld [vmem:[%s2 + $0x1e8] sm:$0xff]
    %v108 = vld [vmem:[%s2 + $0x1f0] sm:$0xff]
    %v109 = vld [vmem:[%s2 + $0x1f8] sm:$0xff]
    %v110 = vld [vmem:[%s2 + $0x200] sm:$0xff]
    %v111 = vld [vmem:[%s2 + $0x208] sm:$0xff]
    %v112 = vld [vmem:[%s2 + $0x210] sm:$0xff]
    %v113 = vld [vmem:[%s2 + $0x218] sm:$0xff]
    %v114 = vld [vmem:[%s2 + $0x220] sm:$0xff]
    %v115 = vld [vmem:[%s2 + $0x228] sm:$0xff]
    %v116 = vld [vmem:[%s2 + $0x230] sm:$0xff]
    %v117 = vld [vmem:[%s2 + $0x238] sm:$0xff]
    %v118 = vld [vmem:[%s2 + $0x240] sm:$0xff]
    %v119 = vld [vmem:[%s2 + $0x248] sm:$0xff]
    %v120 = vld [vmem:[%s2 + $0x250] sm:$0xff]
    %v121 = vld [vmem:[%s2 + $0x258] sm:$0xff]
    %v122 = vld [vmem:[%s2 + $0x260] sm:$0xff]
    %v123 = vld [vmem:[%s2 + $0x268] sm:$0xff]
    %v124 = vld [vmem:[%s2 + $0x270] sm:$0xff]
    %v125 = vld [vmem:[%s2 + $0x278] sm:$0xff]
    %v126 = vld [vmem:[%s2 + $0x280] sm:$0xff]
    %v127 = vld [vmem:[%s2 + $0x288] sm:$0xff]
    %v128 = vld [vmem:[%s2 + $0x290] sm:$0xff]
    %v129 = vld [vmem:[%s2 + $0x298] sm:$0xff]
    %v130 = vld [vmem:[%s2 + $0x2a0] sm:$0xff]
    %v131 = vld [vmem:[%s2 + $0x2a8] sm:$0xff]
    %v132 = vld [vmem:[%s2 + $0x2b0] sm:$0xff]
    %v133 = vld [vmem:[%s2 + $0x2b8] sm:$0xff]
    %v134 = vld [vmem:[%s2 + $0x2c0] sm:$0xff]
    %v135 = vld [vmem:[%s2 + $0x2c8] sm:$0xff]
    %v136 = vld [vmem:[%s2 + $0x2d0] sm:$0xff]
    %v137 = vld [vmem:[%s2 + $0x2d8] sm:$0xff]
    %v138 = vld [vmem:[%s2 + $0x2e0] sm:$0xff]
    %v139 = vld [vmem:[%s2 + $0x2e8] sm:$0xff]
    %v140 = vld [vmem:[%s2 + $0x2f0] sm:$0xff]
    %v141 = vld [vmem:[%s2 + $0x2f8] sm:$0xff]
    %v142 = vld [vmem:[%s2 + $0x300] sm:$0xff]
    %v143 = vld [vmem:[%s2 + $0x308] sm:$0xff]
    %v144 = vld [vmem:[%s2 + $0x310] sm:$0xff]
    %v145 = vld [vmem:[%s2 + $0x318] sm:$0xff]
    %v146 = vld [vmem:[%s2 + $0x320] sm:$0xff]
    %v147 = vld [vmem:[%s2 + $0x328] sm:$0xff]
    %v148 = vld [vmem:[%s2 + $0x330] sm:$0xff]
    %v149 = vld [vmem:[%s2 + $0x338] sm:$0xff]
    %v150 = vld [vmem:[%s2 + $0x340] sm:$0xff]
    %v151 = vld [vmem:[%s2 + $0x348] sm:$0xff]
    %v152 = vld [vmem:[%s2 + $0x350] sm:$0xff]
    %v153 = vld [vmem:[%s2 + $0x358] sm:$0xff]
    %v154 = vld [vmem:[%s2 + $0x360] sm:$0xff]
    %v155 = vld [vmem:[%s2 + $0x368] sm:$0xff]
    %v156 = vld [vmem:[%s2 + $0x370] sm:$0xff]
    %v157 = vld [vmem:[%s2 + $0x378] sm:$0xff]
    %v158 = vld [vmem:[%s2 + $0x380] sm:$0xff]
    %v159 = vld [vmem:[%s2 + $0x388] sm:$0xff]
    %v160 = vld [vmem:[%s2 + $0x390] sm:$0xff]
    %v161 = vld [vmem:[%s2 + $0x398] sm:$0xff]
    %v162 = vld [vmem:[%s2 + $0x3a0] sm:$0xff]
    %v163 = vld [vmem:[%s2 + $0x3a8] sm:$0xff]
    %v164 = vld [vmem:[%s2 + $0x3b0] sm:$0xff]
    %v165 = vld [vmem:[%s2 + $0x3b8] sm:$0xff]
    %v166 = vld [vmem:[%s2 + $0x3c0] sm:$0xff]
    %v167 = vld [vmem:[%s2 + $0x3c8] sm:$0xff]
    %v168 = vld [vmem:[%s2 + $0x3d0] sm:$0xff]
    %v169 = vld [vmem:[%s2 + $0x3d8] sm:$0xff]
    %v170 = vld [vmem:[%s2 + $0x3e0] sm:$0xff]
    %v171 = vld [vmem:[%s2 + $0x3e8] sm:$0xff]
    %v172 = vld [vmem:[%s2 + $0x3f0] sm:$0xff]
    %v173 = vld [vmem:[%s2 + $0x3f8] sm:$0xff]
    %v174 = vld [vmem:[%s6] sm:$0x1]
    %v175 = vlaneseq
    %v176 = vshrl.u32 %v175, 7
    %v177 = vsub.s32 0, %v176
    %v178 = vrot.slane %v174, %v177
    %v181 = vcombine.high %v27, %v27
    %v183 = vunpack.c.l.s4 1983009808
    %v184 = vunpack.c.0.s8 %v183
    %v185 = vlaneseq
    %v186 = vshrl.u32 %v185, 7
    %v187 = vsub.s32 %v184, %v186
    %v188 = vrot.slane %v27, %v187
    %v190 = vunpack.c.l.s4 1983009808
    %v191 = vunpack.c.0.s8 %v190
    %v192 = vlaneseq
    %v193 = vshrl.u32 %v192, 7
    %v194 = vsub.s32 %v191, %v193
    %v195 = vrot.slane %v181, %v194
    %v196 = vcombine.high %v188, %v188
    %v197 = vcombine.high %v195, %v195
    %v198 = vcombine.high %v28, %v28
    %v200 = vunpack.c.l.s4 1983009808
    %v201 = vunpack.c.0.s8 %v200
    %v202 = vlaneseq
    %v203 = vshrl.u32 %v202, 7
    %v204 = vsub.s32 %v201, %v203
    %v205 = vrot.slane %v28, %v204
    %v207 = vunpack.c.l.s4 1983009808
    %v208 = vunpack.c.0.s8 %v207
    %v209 = vlaneseq
    %v210 = vshrl.u32 %v209, 7
    %v211 = vsub.s32 %v208, %v210
    %v212 = vrot.slane %v198, %v211
    %v213 = vcombine.high %v205, %v205
    %v214 = vcombine.high %v212, %v212
    %223 = vmatprep.subr.mxu0 0.0
    %224 = vmatpush1.msra.mxu0 %v46
    %225 = vmatprep.subr.mxu0 0.0
    %226 = vmatpush1.msra.mxu0 %v47
    %227 = vmatprep.subr.mxu0 0.0
    %228 = vmatpush1.msra.mxu0 %v48
    %229 = vmatprep.subr.mxu0 0.0
    %230 = vmatpush1.msra.mxu0 %v49
    %231 = vmatprep.subr.mxu0 0.0
    %232 = vmatpush1.msra.mxu0 %v50
    %233 = vmatprep.subr.mxu0 0.0
    %234 = vmatpush1.msra.mxu0 %v51
    %235 = vmatprep.subr.mxu0 0.0
    %236 = vmatpush1.msra.mxu0 %v52
    %237 = vmatprep.subr.mxu0 0.0
    %238 = vmatpush1.msra.mxu0 %v53
    %239 = vmatprep.subr.mxu0 0.0
    %240 = vmatpush1.msra.mxu0 %v54
    %241 = vmatprep.subr.mxu0 0.0
    %242 = vmatpush1.msra.mxu0 %v55
    %243 = vmatprep.subr.mxu0 0.0
    %244 = vmatpush1.msra.mxu0 %v56
    %245 = vmatprep.subr.mxu0 0.0
    %246 = vmatpush1.msra.mxu0 %v57
    %247 = vmatprep.subr.mxu0 0.0
    %248 = vmatpush1.msra.mxu0 %v58
    %249 = vmatprep.subr.mxu0 0.0
    %250 = vmatpush1.msra.mxu0 %v59
    %251 = vmatprep.subr.mxu0 0.0
    %252 = vmatpush1.msra.mxu0 %v60
    %253 = vmatprep.subr.mxu0 0.0
    %254 = vmatpush1.msra.mxu0 %v61
    %255 = vmatprep.subr.mxu0 0.0
    %256 = vmatpush1.msra.mxu0 %v62
    %257 = vmatprep.subr.mxu0 0.0
    %258 = vmatpush1.msra.mxu0 %v63
    %259 = vmatprep.subr.mxu0 0.0
    %260 = vmatpush1.msra.mxu0 %v64
    %261 = vmatprep.subr.mxu0 0.0
    %262 = vmatpush1.msra.mxu0 %v65
    %263 = vmatprep.subr.mxu0 0.0
    %264 = vmatpush1.msra.mxu0 %v66
    %265 = vmatprep.subr.mxu0 0.0
    %266 = vmatpush1.msra.mxu0 %v67
    %267 = vmatprep.subr.mxu0 0.0
    %268 = vmatpush1.msra.mxu0 %v68
    %269 = vmatprep.subr.mxu0 0.0
    %270 = vmatpush1.msra.mxu0 %v69
    %271 = vmatprep.subr.mxu0 0.0
    %272 = vmatpush1.msra.mxu0 %v70
    %273 = vmatprep.subr.mxu0 0.0
    %274 = vmatpush1.msra.mxu0 %v71
    %275 = vmatprep.subr.mxu0 0.0
    %276 = vmatpush1.msra.mxu0 %v72
    %277 = vmatprep.subr.mxu0 0.0
    %278 = vmatpush1.msra.mxu0 %v73
    %279 = vmatprep.subr.mxu0 0.0
    %280 = vmatpush1.msra.mxu0 %v74
    %281 = vmatprep.subr.mxu0 0.0
    %282 = vmatpush1.msra.mxu0 %v75
    %283 = vmatprep.subr.mxu0 0.0
    %284 = vmatpush1.msra.mxu0 %v76
    %285 = vmatprep.subr.mxu0 0.0
    %286 = vmatpush1.msra.mxu0 %v77
    %287 = vmatprep.mubr.f32.mxu0 %v196
    %288 = vmatmul.mubr.f32.gmra.mrb[0].mxu0 %v188
    %v289 = vpop.f32.mrb[0].mxu0
    %v290 = vadd.f32 %v178, %v289
    %v291 = vpop.f32.mrb[0].mxu0
    %292 = vdwg.mxu0
    %293 = vmatprep.subr.mxu0 0.0
    %294 = vmatpush1.msra.mxu0 %v78
    %295 = vmatprep.subr.mxu0 0.0
    %296 = vmatpush1.msra.mxu0 %v79
    %297 = vmatprep.subr.mxu0 0.0
    %298 = vmatpush1.msra.mxu0 %v80
    %299 = vmatprep.subr.mxu0 0.0
    %300 = vmatpush1.msra.mxu0 %v81
    %301 = vmatprep.subr.mxu0 0.0
    %302 = vmatpush1.msra.mxu0 %v82
    %303 = vmatprep.subr.mxu0 0.0
    %304 = vmatpush1.msra.mxu0 %v83
    %305 = vmatprep.subr.mxu0 0.0
    %306 = vmatpush1.msra.mxu0 %v84
    %307 = vmatprep.subr.mxu0 0.0
    %308 = vmatpush1.msra.mxu0 %v85
    %309 = vmatprep.subr.mxu0 0.0
    %310 = vmatpush1.msra.mxu0 %v86
    %311 = vmatprep.subr.mxu0 0.0
    %312 = vmatpush1.msra.mxu0 %v87
    %313 = vmatprep.subr.mxu0 0.0
    %314 = vmatpush1.msra.mxu0 %v88
    %315 = vmatprep.subr.mxu0 0.0
    %316 = vmatpush1.msra.mxu0 %v89
    %317 = vmatprep.subr.mxu0 0.0
    %318 = vmatpush1.msra.mxu0 %v90
    %319 = vmatprep.subr.mxu0 0.0
    %320 = vmatpush1.msra.mxu0 %v91
    %321 = vmatprep.subr.mxu0 0.0
    %322 = vmatpush1.msra.mxu0 %v92
    %323 = vmatprep.subr.mxu0 0.0
    %324 = vmatpush1.msra.mxu0 %v93
    %325 = vmatprep.subr.mxu0 0.0
    %326 = vmatpush1.msra.mxu0 %v94
    %327 = vmatprep.subr.mxu0 0.0
    %328 = vmatpush1.msra.mxu0 %v95
    %329 = vmatprep.subr.mxu0 0.0
    %330 = vmatpush1.msra.mxu0 %v96
    %331 = vmatprep.subr.mxu0 0.0
    %332 = vmatpush1.msra.mxu0 %v97
    %333 = vmatprep.subr.mxu0 0.0
    %334 = vmatpush1.msra.mxu0 %v98
    %335 = vmatprep.subr.mxu0 0.0
    %336 = vmatpush1.msra.mxu0 %v99
    %337 = vmatprep.subr.mxu0 0.0
    %338 = vmatpush1.msra.mxu0 %v100
    %339 = vmatprep.subr.mxu0 0.0
    %340 = vmatpush1.msra.mxu0 %v101
    %341 = vmatprep.subr.mxu0 0.0
    %342 = vmatpush1.msra.mxu0 %v102
    %343 = vmatprep.subr.mxu0 0.0
    %344 = vmatpush1.msra.mxu0 %v103
    %345 = vmatprep.subr.mxu0 0.0
    %346 = vmatpush1.msra.mxu0 %v104
    %347 = vmatprep.subr.mxu0 0.0
    %348 = vmatpush1.msra.mxu0 %v105
    %349 = vmatprep.subr.mxu0 0.0
    %350 = vmatpush1.msra.mxu0 %v106
    %351 = vmatprep.subr.mxu0 0.0
    %352 = vmatpush1.msra.mxu0 %v107
    %353 = vmatprep.subr.mxu0 0.0
    %354 = vmatpush1.msra.mxu0 %v108
    %355 = vmatprep.subr.mxu0 0.0
    %356 = vmatpush1.msra.mxu0 %v109
    %357 = vmatprep.mubr.f32.mxu0 %v197
    %358 = vmatmul.mubr.f32.gmra.mrb[0].mxu0 %v195
    %v359 = vpop.f32.mrb[0].mxu0
    %v360 = vadd.f32 %v290, %v359
    %v361 = vpop.f32.mrb[0].mxu0
    %362 = vdwg.mxu0
    %363 = vmatprep.subr.mxu0 0.0
    %364 = vmatpush1.msra.mxu0 %v110
    %365 = vmatprep.subr.mxu0 0.0
    %366 = vmatpush1.msra.mxu0 %v111
    %367 = vmatprep.subr.mxu0 0.0
    %368 = vmatpush1.msra.mxu0 %v112
    %369 = vmatprep.subr.mxu0 0.0
    %370 = vmatpush1.msra.mxu0 %v113
    %371 = vmatprep.subr.mxu0 0.0
    %372 = vmatpush1.msra.mxu0 %v114
    %373 = vmatprep.subr.mxu0 0.0
    %374 = vmatpush1.msra.mxu0 %v115
    %375 = vmatprep.subr.mxu0 0.0
    %376 = vmatpush1.msra.mxu0 %v116
    %377 = vmatprep.subr.mxu0 0.0
    %378 = vmatpush1.msra.mxu0 %v117
    %379 = vmatprep.subr.mxu0 0.0
    %380 = vmatpush1.msra.mxu0 %v118
    %381 = vmatprep.subr.mxu0 0.0
    %382 = vmatpush1.msra.mxu0 %v119
    %383 = vmatprep.subr.mxu0 0.0
    %384 = vmatpush1.msra.mxu0 %v120
    %385 = vmatprep.subr.mxu0 0.0
    %386 = vmatpush1.msra.mxu0 %v121
    %387 = vmatprep.subr.mxu0 0.0
    %388 = vmatpush1.msra.mxu0 %v122
    %389 = vmatprep.subr.mxu0 0.0
    %390 = vmatpush1.msra.mxu0 %v123
    %391 = vmatprep.subr.mxu0 0.0
    %392 = vmatpush1.msra.mxu0 %v124
    %393 = vmatprep.subr.mxu0 0.0
    %394 = vmatpush1.msra.mxu0 %v125
    %395 = vmatprep.subr.mxu0 0.0
    %396 = vmatpush1.msra.mxu0 %v126
    %397 = vmatprep.subr.mxu0 0.0
    %398 = vmatpush1.msra.mxu0 %v127
    %399 = vmatprep.subr.mxu0 0.0
    %400 = vmatpush1.msra.mxu0 %v128
    %401 = vmatprep.subr.mxu0 0.0
    %402 = vmatpush1.msra.mxu0 %v129
    %403 = vmatprep.subr.mxu0 0.0
    %404 = vmatpush1.msra.mxu0 %v130
    %405 = vmatprep.subr.mxu0 0.0
    %406 = vmatpush1.msra.mxu0 %v131
    %407 = vmatprep.subr.mxu0 0.0
    %408 = vmatpush1.msra.mxu0 %v132
    %409 = vmatprep.subr.mxu0 0.0
    %410 = vmatpush1.msra.mxu0 %v133
    %411 = vmatprep.subr.mxu0 0.0
    %412 = vmatpush1.msra.mxu0 %v134
    %413 = vmatprep.subr.mxu0 0.0
    %414 = vmatpush1.msra.mxu0 %v135
    %415 = vmatprep.subr.mxu0 0.0
    %416 = vmatpush1.msra.mxu0 %v136
    %417 = vmatprep.subr.mxu0 0.0
    %418 = vmatpush1.msra.mxu0 %v137
    %419 = vmatprep.subr.mxu0 0.0
    %420 = vmatpush1.msra.mxu0 %v138
    %421 = vmatprep.subr.mxu0 0.0
    %422 = vmatpush1.msra.mxu0 %v139
    %423 = vmatprep.subr.mxu0 0.0
    %424 = vmatpush1.msra.mxu0 %v140
    %425 = vmatprep.subr.mxu0 0.0
    %426 = vmatpush1.msra.mxu0 %v141
    %427 = vmatprep.mubr.f32.mxu0 %v213
    %428 = vmatmul.mubr.f32.gmra.mrb[0].mxu0 %v205
    %v429 = vpop.f32.mrb[0].mxu0
    %v430 = vadd.f32 %v360, %v429
    %v431 = vpop.f32.mrb[0].mxu0
    %432 = vdwg.mxu0
    %433 = vmatprep.subr.mxu0 0.0
    %434 = vmatpush1.msra.mxu0 %v142
    %435 = vmatprep.subr.mxu0 0.0
    %436 = vmatpush1.msra.mxu0 %v143
    %437 = vmatprep.subr.mxu0 0.0
    %438 = vmatpush1.msra.mxu0 %v144
    %439 = vmatprep.subr.mxu0 0.0
    %440 = vmatpush1.msra.mxu0 %v145
    %441 = vmatprep.subr.mxu0 0.0
    %442 = vmatpush1.msra.mxu0 %v146
    %443 = vmatprep.subr.mxu0 0.0
    %444 = vmatpush1.msra.mxu0 %v147
    %445 = vmatprep.subr.mxu0 0.0
    %446 = vmatpush1.msra.mxu0 %v148
    %447 = vmatprep.subr.mxu0 0.0
    %448 = vmatpush1.msra.mxu0 %v149
    %449 = vmatprep.subr.mxu0 0.0
    %450 = vmatpush1.msra.mxu0 %v150
    %451 = vmatprep.subr.mxu0 0.0
    %452 = vmatpush1.msra.mxu0 %v151
    %453 = vmatprep.subr.mxu0 0.0
    %454 = vmatpush1.msra.mxu0 %v152
    %455 = vmatprep.subr.mxu0 0.0
    %456 = vmatpush1.msra.mxu0 %v153
    %457 = vmatprep.subr.mxu0 0.0
    %458 = vmatpush1.msra.mxu0 %v154
    %459 = vmatprep.subr.mxu0 0.0
    %460 = vmatpush1.msra.mxu0 %v155
    %461 = vmatprep.subr.mxu0 0.0
    %462 = vmatpush1.msra.mxu0 %v156
    %463 = vmatprep.subr.mxu0 0.0
    %464 = vmatpush1.msra.mxu0 %v157
    %465 = vmatprep.subr.mxu0 0.0
    %466 = vmatpush1.msra.mxu0 %v158
    %467 = vmatprep.subr.mxu0 0.0
    %468 = vmatpush1.msra.mxu0 %v159
    %469 = vmatprep.subr.mxu0 0.0
    %470 = vmatpush1.msra.mxu0 %v160
    %471 = vmatprep.subr.mxu0 0.0
    %472 = vmatpush1.msra.mxu0 %v161
    %473 = vmatprep.subr.mxu0 0.0
    %474 = vmatpush1.msra.mxu0 %v162
    %475 = vmatprep.subr.mxu0 0.0
    %476 = vmatpush1.msra.mxu0 %v163
    %477 = vmatprep.subr.mxu0 0.0
    %478 = vmatpush1.msra.mxu0 %v164
    %479 = vmatprep.subr.mxu0 0.0
    %480 = vmatpush1.msra.mxu0 %v165
    %481 = vmatprep.subr.mxu0 0.0
    %482 = vmatpush1.msra.mxu0 %v166
    %483 = vmatprep.subr.mxu0 0.0
    %484 = vmatpush1.msra.mxu0 %v167
    %485 = vmatprep.subr.mxu0 0.0
    %486 = vmatpush1.msra.mxu0 %v168
    %487 = vmatprep.subr.mxu0 0.0
    %488 = vmatpush1.msra.mxu0 %v169
    %489 = vmatprep.subr.mxu0 0.0
    %490 = vmatpush1.msra.mxu0 %v170
    %491 = vmatprep.subr.mxu0 0.0
    %492 = vmatpush1.msra.mxu0 %v171
    %493 = vmatprep.subr.mxu0 0.0
    %494 = vmatpush1.msra.mxu0 %v172
    %495 = vmatprep.subr.mxu0 0.0
    %496 = vmatpush1.msra.mxu0 %v173
    %497 = vmatprep.mubr.f32.mxu0 %v214
    %498 = vmatmul.mubr.f32.gmra.mrb[0].mxu0 %v212
    %v499 = vpop.f32.mrb[0].mxu0
    %v500 = vadd.f32 %v430, %v499
    %v501 = vpop.f32.mrb[0].mxu0
    %502 = vdwg.mxu0
    %v503 = vmax.f32 %v500, 0.0
    %v504 = vld [vmem:[%s3] sm:$0xff]
    %v505 = vld [vmem:[%s3 + $0x8] sm:$0xff]
    %v506 = vld [vmem:[%s3 + $0x10] sm:$0xff]
    %v507 = vld [vmem:[%s3 + $0x18] sm:$0xff]
    %v508 = vld [vmem:[%s6 + $0x1] sm:$0x1]
    %v509 = vlaneseq
    %v510 = vshrl.u32 %v509, 7
    %v511 = vsub.s32 0, %v510
    %v512 = vrot.slane %v508, %v511
    %vm515 = vcmask 1041409
    %v516 = vsel %vm515, %v45, %v38
    %v517 = vsel %vm31, %v516, 0
    %519 = vmatprep.subr.mxu0 0.0
    %520 = vmatpush1.msra.mxu0 %v504
    %521 = vmatprep.subr.mxu0 0.0
    %522 = vmatpush1.msra.mxu0 %v505
    %523 = vmatprep.subr.mxu0 0.0
    %524 = vmatpush1.msra.mxu0 %v506
    %525 = vmatprep.subr.mxu0 0.0
    %526 = vmatpush1.msra.mxu0 %v507
    %527 = vmatprep.subr.mxu0 0.0
    %528 = vmatpush1.msra.mxu0 0.0
    %529 = vmatprep.subr.mxu0 0.0
    %530 = vmatpush1.msra.mxu0 0.0
    %531 = vmatprep.subr.mxu0 0.0
    %532 = vmatpush1.msra.mxu0 0.0
    %533 = vmatprep.subr.mxu0 0.0
    %534 = vmatpush1.msra.mxu0 0.0
    %535 = vmatprep.subr.mxu0 0.0
    %536 = vmatpush1.msra.mxu0 0.0
    %537 = vmatprep.subr.mxu0 0.0
    %538 = vmatpush1.msra.mxu0 0.0
    %539 = vmatprep.subr.mxu0 0.0
    %540 = vmatpush1.msra.mxu0 0.0
    %541 = vmatprep.subr.mxu0 0.0
    %542 = vmatpush1.msra.mxu0 0.0
    %543 = vmatprep.subr.mxu0 0.0
    %544 = vmatpush1.msra.mxu0 0.0
    %545 = vmatprep.subr.mxu0 0.0
    %546 = vmatpush1.msra.mxu0 0.0
    %547 = vmatprep.subr.mxu0 0.0
    %548 = vmatpush1.msra.mxu0 0.0
    %549 = vmatprep.subr.mxu0 0.0
    %550 = vmatpush1.msra.mxu0 0.0
    %551 = vmatprep.subr.mxu0 0.0
    %552 = vmatpush1.msra.mxu0 0.0
    %553 = vmatprep.subr.mxu0 0.0
    %554 = vmatpush1.msra.mxu0 0.0
    %555 = vmatprep.subr.mxu0 0.0
    %556 = vmatpush1.msra.mxu0 0.0
    %557 = vmatprep.subr.mxu0 0.0
    %558 = vmatpush1.msra.mxu0 0.0
    %559 = vmatprep.subr.mxu0 0.0
    %560 = vmatpush1.msra.mxu0 0.0
    %561 = vmatprep.subr.mxu0 0.0
    %562 = vmatpush1.msra.mxu0 0.0
    %563 = vmatprep.subr.mxu0 0.0
    %564 = vmatpush1.msra.mxu0 0.0
    %565 = vmatprep.subr.mxu0 0.0
    %566 = vmatpush1.msra.mxu0 0.0
    %567 = vmatprep.subr.mxu0 0.0
    %568 = vmatpush1.msra.mxu0 0.0
    %569 = vmatprep.subr.mxu0 0.0
    %570 = vmatpush1.msra.mxu0 0.0
    %571 = vmatprep.subr.mxu0 0.0
    %572 = vmatpush1.msra.mxu0 0.0
    %573 = vmatprep.subr.mxu0 0.0
    %574 = vmatpush1.msra.mxu0 0.0
    %575 = vmatprep.subr.mxu0 0.0
    %576 = vmatpush1.msra.mxu0 0.0
    %577 = vmatprep.subr.mxu0 0.0
    %578 = vmatpush1.msra.mxu0 0.0
    %579 = vmatprep.subr.mxu0 0.0
    %580 = vmatpush1.msra.mxu0 0.0
    %581 = vmatprep.subr.mxu0 0.0
    %582 = vmatpush1.msra.mxu0 0.0
    %583 = vmatprep.mubr.f32.mxu0 0.0
    %584 = vmatmul.mubr.f32.gmra.mrb[0].mxu0 %v517
    %v585 = vpop.f32.mrb[0].mxu0
    %v586 = vadd.f32 %v512, %v585
    %v587 = vpop.f32.mrb[0].mxu0
    %588 = vdwg.mxu0
    %v589 = vmax.f32 %v586, 0.0
    %v590 = vld [vmem:[%s4] sm:$0xff]
    %v591 = vld [vmem:[%s4 + $0x8] sm:$0xff]
    %v592 = vld [vmem:[%s4 + $0x10] sm:$0xff]
    %v593 = vld [vmem:[%s4 + $0x18] sm:$0xff]
    %v594 = vld [vmem:[%s4 + $0x20] sm:$0xff]
    %v595 = vld [vmem:[%s4 + $0x28] sm:$0xff]
    %v596 = vld [vmem:[%s4 + $0x30] sm:$0xff]
    %v597 = vld [vmem:[%s4 + $0x38] sm:$0xff]
    %s598 = scalar_lea.vmem %s4, 64
    %v599 = vld [vmem:[%s598] sm:$0xff]
    %v600 = vld [vmem:[%s598 + $0x8] sm:$0xff]
    %v601 = vld [vmem:[%s598 + $0x10] sm:$0xff]
    %v602 = vld [vmem:[%s598 + $0x18] sm:$0xff]
    %v603 = vld [vmem:[%s598 + $0x20] sm:$0xff]
    %v604 = vld [vmem:[%s598 + $0x28] sm:$0xff]
    %v605 = vld [vmem:[%s598 + $0x30] sm:$0xff]
    %v606 = vld [vmem:[%s598 + $0x38] sm:$0xff]
    %vm607 = vcmask 523264
    %v609 = vsel %vm607, %v589, 0
    %611 = vmatprep.subr.mxu0 0.0
    %612 = vmatpush1.msra.mxu0 %v599
    %613 = vmatprep.subr.mxu0 0.0
    %614 = vmatpush1.msra.mxu0 %v600
    %615 = vmatprep.subr.mxu0 0.0
    %616 = vmatpush1.msra.mxu0 %v601
    %617 = vmatprep.subr.mxu0 0.0
    %618 = vmatpush1.msra.mxu0 %v602
    %619 = vmatprep.subr.mxu0 0.0
    %620 = vmatpush1.msra.mxu0 %v603
    %621 = vmatprep.subr.mxu0 0.0
    %622 = vmatpush1.msra.mxu0 %v604
    %623 = vmatprep.subr.mxu0 0.0
    %624 = vmatpush1.msra.mxu0 %v605
    %625 = vmatprep.subr.mxu0 0.0
    %626 = vmatpush1.msra.mxu0 %v606
    %627 = vmatprep.subr.mxu0 0.0
    %628 = vmatpush1.msra.mxu0 0.0
    %629 = vmatprep.subr.mxu0 0.0
    %630 = vmatpush1.msra.mxu0 0.0
    %631 = vmatprep.subr.mxu0 0.0
    %632 = vmatpush1.msra.mxu0 0.0
    %633 = vmatprep.subr.mxu0 0.0
    %634 = vmatpush1.msra.mxu0 0.0
    %635 = vmatprep.subr.mxu0 0.0
    %636 = vmatpush1.msra.mxu0 0.0
    %637 = vmatprep.subr.mxu0 0.0
    %638 = vmatpush1.msra.mxu0 0.0
    %639 = vmatprep.subr.mxu0 0.0
    %640 = vmatpush1.msra.mxu0 0.0
    %641 = vmatprep.subr.mxu0 0.0
    %642 = vmatpush1.msra.mxu0 0.0
    %643 = vmatprep.subr.mxu0 0.0
    %644 = vmatpush1.msra.mxu0 0.0
    %645 = vmatprep.subr.mxu0 0.0
    %646 = vmatpush1.msra.mxu0 0.0
    %647 = vmatprep.subr.mxu0 0.0
    %648 = vmatpush1.msra.mxu0 0.0
    %649 = vmatprep.subr.mxu0 0.0
    %650 = vmatpush1.msra.mxu0 0.0
    %651 = vmatprep.subr.mxu0 0.0
    %652 = vmatpush1.msra.mxu0 0.0
    %653 = vmatprep.subr.mxu0 0.0
    %654 = vmatpush1.msra.mxu0 0.0
    %655 = vmatprep.subr.mxu0 0.0
    %656 = vmatpush1.msra.mxu0 0.0
    %657 = vmatprep.subr.mxu0 0.0
    %658 = vmatpush1.msra.mxu0 0.0
    %659 = vmatprep.subr.mxu0 0.0
    %660 = vmatpush1.msra.mxu0 0.0
    %661 = vmatprep.subr.mxu0 0.0
    %662 = vmatpush1.msra.mxu0 0.0
    %663 = vmatprep.subr.mxu0 0.0
    %664 = vmatpush1.msra.mxu0 0.0
    %665 = vmatprep.subr.mxu0 0.0
    %666 = vmatpush1.msra.mxu0 0.0
    %667 = vmatprep.subr.mxu0 0.0
    %668 = vmatpush1.msra.mxu0 0.0
    %669 = vmatprep.subr.mxu0 0.0
    %670 = vmatpush1.msra.mxu0 0.0
    %671 = vmatprep.subr.mxu0 0.0
    %672 = vmatpush1.msra.mxu0 0.0
    %673 = vmatprep.subr.mxu0 0.0
    %674 = vmatpush1.msra.mxu0 0.0
    %675 = vmatprep.mubr.f32.mxu0 0.0
    %676 = vmatmul.mubr.f32.gmra.mrb[0].mxu0 %v609
    %v677 = vpop.f32.mrb[0].mxu0
    %v678 = vadd.f32 0.0, %v677
    %v679 = vpop.f32.mrb[0].mxu0
    %680 = vdwg.mxu0
    %v682 = vsel %vm607, %v503, 0
    %684 = vmatprep.subr.mxu0 0.0
    %685 = vmatpush1.msra.mxu0 %v590
    %686 = vmatprep.subr.mxu0 0.0
    %687 = vmatpush1.msra.mxu0 %v591
    %688 = vmatprep.subr.mxu0 0.0
    %689 = vmatpush1.msra.mxu0 %v592
    %690 = vmatprep.subr.mxu0 0.0
    %691 = vmatpush1.msra.mxu0 %v593
    %692 = vmatprep.subr.mxu0 0.0
    %693 = vmatpush1.msra.mxu0 %v594
    %694 = vmatprep.subr.mxu0 0.0
    %695 = vmatpush1.msra.mxu0 %v595
    %696 = vmatprep.subr.mxu0 0.0
    %697 = vmatpush1.msra.mxu0 %v596
    %698 = vmatprep.subr.mxu0 0.0
    %699 = vmatpush1.msra.mxu0 %v597
    %700 = vmatprep.subr.mxu0 0.0
    %701 = vmatpush1.msra.mxu0 0.0
    %702 = vmatprep.subr.mxu0 0.0
    %703 = vmatpush1.msra.mxu0 0.0
    %704 = vmatprep.subr.mxu0 0.0
    %705 = vmatpush1.msra.mxu0 0.0
    %706 = vmatprep.subr.mxu0 0.0
    %707 = vmatpush1.msra.mxu0 0.0
    %708 = vmatprep.subr.mxu0 0.0
    %709 = vmatpush1.msra.mxu0 0.0
    %710 = vmatprep.subr.mxu0 0.0
    %711 = vmatpush1.msra.mxu0 0.0
    %712 = vmatprep.subr.mxu0 0.0
    %713 = vmatpush1.msra.mxu0 0.0
    %714 = vmatprep.subr.mxu0 0.0
    %715 = vmatpush1.msra.mxu0 0.0
    %716 = vmatprep.subr.mxu0 0.0
    %717 = vmatpush1.msra.mxu0 0.0
    %718 = vmatprep.subr.mxu0 0.0
    %719 = vmatpush1.msra.mxu0 0.0
    %720 = vmatprep.subr.mxu0 0.0
    %721 = vmatpush1.msra.mxu0 0.0
    %722 = vmatprep.subr.mxu0 0.0
    %723 = vmatpush1.msra.mxu0 0.0
    %724 = vmatprep.subr.mxu0 0.0
    %725 = vmatpush1.msra.mxu0 0.0
    %726 = vmatprep.subr.mxu0 0.0
    %727 = vmatpush1.msra.mxu0 0.0
    %728 = vmatprep.subr.mxu0 0.0
    %729 = vmatpush1.msra.mxu0 0.0
    %730 = vmatprep.subr.mxu0 0.0
    %731 = vmatpush1.msra.mxu0 0.0
    %732 = vmatprep.subr.mxu0 0.0
    %733 = vmatpush1.msra.mxu0 0.0
    %734 = vmatprep.subr.mxu0 0.0
    %735 = vmatpush1.msra.mxu0 0.0
    %736 = vmatprep.subr.mxu0 0.0
    %737 = vmatpush1.msra.mxu0 0.0
    %738 = vmatprep.subr.mxu0 0.0
    %739 = vmatpush1.msra.mxu0 0.0
    %740 = vmatprep.subr.mxu0 0.0
    %741 = vmatpush1.msra.mxu0 0.0
    %742 = vmatprep.subr.mxu0 0.0
    %743 = vmatpush1.msra.mxu0 0.0
    %744 = vmatprep.subr.mxu0 0.0
    %745 = vmatpush1.msra.mxu0 0.0
    %746 = vmatprep.subr.mxu0 0.0
    %747 = vmatpush1.msra.mxu0 0.0
    %748 = vmatprep.mubr.f32.mxu0 0.0
    %749 = vmatmul.mubr.f32.gmra.mrb[0].mxu0 %v682
    %v750 = vpop.f32.mrb[0].mxu0
    %v751 = vadd.f32 %v678, %v750
    %v752 = vpop.f32.mrb[0].mxu0
    %753 = vdwg.mxu0
    %v754 = vld [vmem:[%s6 + $0x2] sm:$0x1]
    %v755 = vlaneseq
    %v756 = vshrl.u32 %v755, 7
    %v757 = vsub.s32 0, %v756
    %v758 = vrot.slane %v754, %v757
    %v759 = vadd.f32 %v751, %v758
    %v760 = vmax.f32 %v759, 0.0
    %v761 = vld [vmem:[%s5] sm:$0xff]
    %v762 = vld [vmem:[%s5 + $0x8] sm:$0xff]
    %v763 = vld [vmem:[%s5 + $0x10] sm:$0xff]
    %v764 = vld [vmem:[%s5 + $0x18] sm:$0xff]
    %v765 = vld [vmem:[%s5 + $0x20] sm:$0xff]
    %v766 = vld [vmem:[%s5 + $0x28] sm:$0xff]
    %v767 = vld [vmem:[%s5 + $0x30] sm:$0xff]
    %v768 = vld [vmem:[%s5 + $0x38] sm:$0xff]
    %v769 = vld [vmem:[%s6 + $0x3] sm:$0x1]
    %v770 = vlaneseq
    %v771 = vshrl.u32 %v770, 7
    %v772 = vsub.s32 0, %v771
    %v773 = vrot.slane %v769, %v772
    %v775 = vsel %vm607, %v760, 0
    %777 = vmatprep.subr.mxu0 0.0
    %778 = vmatpush1.msra.mxu0 %v761
    %779 = vmatprep.subr.mxu0 0.0
    %780 = vmatpush1.msra.mxu0 %v762
    %781 = vmatprep.subr.mxu0 0.0
    %782 = vmatpush1.msra.mxu0 %v763
    %783 = vmatprep.subr.mxu0 0.0
    %784 = vmatpush1.msra.mxu0 %v764
    %785 = vmatprep.subr.mxu0 0.0
    %786 = vmatpush1.msra.mxu0 %v765
    %787 = vmatprep.subr.mxu0 0.0
    %788 = vmatpush1.msra.mxu0 %v766
    %789 = vmatprep.subr.mxu0 0.0
    %790 = vmatpush1.msra.mxu0 %v767
    %791 = vmatprep.subr.mxu0 0.0
    %792 = vmatpush1.msra.mxu0 %v768
    %793 = vmatprep.subr.mxu0 0.0
    %794 = vmatpush1.msra.mxu0 0.0
    %795 = vmatprep.subr.mxu0 0.0
    %796 = vmatpush1.msra.mxu0 0.0
    %797 = vmatprep.subr.mxu0 0.0
    %798 = vmatpush1.msra.mxu0 0.0
    %799 = vmatprep.subr.mxu0 0.0
    %800 = vmatpush1.msra.mxu0 0.0
    %801 = vmatprep.subr.mxu0 0.0
    %802 = vmatpush1.msra.mxu0 0.0
    %803 = vmatprep.subr.mxu0 0.0
    %804 = vmatpush1.msra.mxu0 0.0
    %805 = vmatprep.subr.mxu0 0.0
    %806 = vmatpush1.msra.mxu0 0.0
    %807 = vmatprep.subr.mxu0 0.0
    %808 = vmatpush1.msra.mxu0 0.0
    %809 = vmatprep.subr.mxu0 0.0
    %810 = vmatpush1.msra.mxu0 0.0
    %811 = vmatprep.subr.mxu0 0.0
    %812 = vmatpush1.msra.mxu0 0.0
    %813 = vmatprep.subr.mxu0 0.0
    %814 = vmatpush1.msra.mxu0 0.0
    %815 = vmatprep.subr.mxu0 0.0
    %816 = vmatpush1.msra.mxu0 0.0
    %817 = vmatprep.subr.mxu0 0.0
    %818 = vmatpush1.msra.mxu0 0.0
    %819 = vmatprep.subr.mxu0 0.0
    %820 = vmatpush1.msra.mxu0 0.0
    %821 = vmatprep.subr.mxu0 0.0
    %822 = vmatpush1.msra.mxu0 0.0
    %823 = vmatprep.subr.mxu0 0.0
    %824 = vmatpush1.msra.mxu0 0.0
    %825 = vmatprep.subr.mxu0 0.0
    %826 = vmatpush1.msra.mxu0 0.0
    %827 = vmatprep.subr.mxu0 0.0
    %828 = vmatpush1.msra.mxu0 0.0
    %829 = vmatprep.subr.mxu0 0.0
    %830 = vmatpush1.msra.mxu0 0.0
    %831 = vmatprep.subr.mxu0 0.0
    %832 = vmatpush1.msra.mxu0 0.0
    %833 = vmatprep.subr.mxu0 0.0
    %834 = vmatpush1.msra.mxu0 0.0
    %835 = vmatprep.subr.mxu0 0.0
    %836 = vmatpush1.msra.mxu0 0.0
    %837 = vmatprep.subr.mxu0 0.0
    %838 = vmatpush1.msra.mxu0 0.0
    %839 = vmatprep.subr.mxu0 0.0
    %840 = vmatpush1.msra.mxu0 0.0
    %841 = vmatprep.mubr.f32.mxu0 0.0
    %842 = vmatmul.mubr.f32.gmra.mrb[0].mxu0 %v775
    %v843 = vpop.f32.mrb[0].mxu0
    %v844 = vadd.f32 %v773, %v843
    %v845 = vpop.f32.mrb[0].mxu0
    %846 = vdwg.mxu0
    %847 = vst [vmem:[#allocation2] sm:$0x3] %v844
    // Predicated region
    $region30: #{tpu_custom_call.1} parent=1 // pred_check
      _
    $region31: #{tpu_custom_call.1} parent=1 // pred_check_branch
      %849 = sbr.rel (0) target = $region33
    $region32: #{tpu_custom_call.1} parent=1 // pred_region
      %s851 = ssub.s32 32, 32
      %852 = vsyncadd [#allocation3], %s851
      %s854 = sshll.u32 [#allocation2], 4
      %s855 = int_to_ptr.vmem [resolvable:$true] %s854
      %857 = dma.vmem_to_hbm [thread:$0]  %s855, 32, %s7, [#allocation3]
    $region33: #{tpu_custom_call.1} parent=1 // pred_fallthru
      _
    // Predicated region
    $region34: #{tpu_custom_call.1} parent=1 // pred_check
      _
    $region35: #{tpu_custom_call.1} parent=1 // pred_check_branch
      %859 = sbr.rel (0) target = $region37
    $region36: #{tpu_custom_call.1} parent=1 // pred_region
      %860 = dma.done [#allocation3], 32
    $region37: #{tpu_custom_call.1} parent=1 // pred_fallthru
      _
    %861 = vsyncpa [#allocation3], 1

</llo_original>
